<compile_context>
chip_gen: v6e
topology: v6e:2x2x1
jax: 0.10.0
libtpu: 0.0.40
codegen_flags: <defaults>
</compile_context>

<pallas_src>
import functools
import math

import jax
import jax.numpy as jnp
from jax import lax
from jax.experimental import pallas as pl
from jax.experimental.pallas import tpu as pltpu

LN_EPS = 1e-5                      # PyTorch nn.LayerNorm default
_INV_SQRT2 = 0.7071067811865476    # 1/sqrt(2), hoisted constant
_MIB = 1024 * 1024

# Exact erf (PyTorch nn.GELU() default).  Set True for tanh-approx GELU: the
# exp/tanh lands on the otherwise-idle EUP slot on v6e/v7x (perf win, small
# numerics change vs the module).  Keep False on v5e / when parity matters.
_GELU_APPROXIMATE = False


def _gelu(h):
    if _GELU_APPROXIMATE:
        return jax.nn.gelu(h, approximate=True)
    return 0.5 * h * (1.0 + lax.erf(h * _INV_SQRT2))


# ----------------------------------------------------------------------------
# Kernels
# ----------------------------------------------------------------------------
def mlp_resident_kernel(x_ref, gamma_ref, beta_ref, w1_ref, b1_ref, w2_ref,
                        b2_ref, o_ref, *, m_chunk):
    """Weights fully resident in VMEM.  Grid: (row tiles,) [parallel]."""
    x = x_ref[...].astype(jnp.float32)

    # ---- LayerNorm (f32) ----
    mean = jnp.mean(x, axis=-1, keepdims=True)
    centered = x - mean
    var = jnp.mean(centered * centered, axis=-1, keepdims=True)
    ln = centered * lax.rsqrt(var + LN_EPS)
    ln = ln * gamma_ref[...].astype(jnp.float32) + beta_ref[...].astype(jnp.float32)
    ln_bf = ln.astype(w1_ref.dtype)                 # bf16 matmul operand

    # Accumulator initialised with residual + output bias: removes the separate
    # zero-init / += / finalize VMEM passes of the old scratch accumulator.
    acc = x + b2_ref[...].astype(jnp.float32)

    m_total = w1_ref.shape[1]
    n_chunks = m_total // m_chunk
    # Static (unrolled) chunk loop over the hidden dim: bounds the f32
    # intermediate to (tm, m_chunk) and interleaves MXU and VALU (GELU) work.
    for c in range(n_chunks):
        lo = c * m_chunk
        h = jnp.dot(ln_bf, w1_ref[:, lo:lo + m_chunk],
                    preferred_element_type=jnp.float32)
        h = h + b1_ref[:, lo:lo + m_chunk].astype(jnp.float32)
        h = _gelu(h)
        # TODO(synk): nn.Dropout is identity at inference; no stochastic masking.
        acc = acc + jnp.dot(h.astype(w2_ref.dtype), w2_ref[lo:lo + m_chunk, :],
                            preferred_element_type=jnp.float32)

    o_ref[...] = acc.astype(o_ref.dtype)


def mlp_streamed_kernel(x_ref, gamma_ref, beta_ref, w1_ref, b1_ref, w2_ref,
                        b2_ref, o_ref, ln_ref, acc_ref):
    """Fallback when weights do not fit VMEM.
    Grid: (row tiles [parallel], hidden tiles [arbitrary, innermost])."""
    j = pl.program_id(1)

    @pl.when(j == 0)
    def _():
        x = x_ref[...].astype(jnp.float32)
        mean = jnp.mean(x, axis=-1, keepdims=True)
        centered = x - mean
        var = jnp.mean(centered * centered, axis=-1, keepdims=True)
        ln = centered * lax.rsqrt(var + LN_EPS)
        ln = ln * gamma_ref[...].astype(jnp.float32) + beta_ref[...].astype(jnp.float32)
        ln_ref[...] = ln.astype(ln_ref.dtype)
        acc_ref[...] = jnp.zeros_like(acc_ref)

    h = jnp.dot(ln_ref[...], w1_ref[...], preferred_element_type=jnp.float32)
    h = h + b1_ref[...].astype(jnp.float32)
    h = _gelu(h)
    acc_ref[...] += jnp.dot(h.astype(w2_ref.dtype), w2_ref[...],
                            preferred_element_type=jnp.float32)

    @pl.when(j == pl.num_programs(1) - 1)
    def _():
        y = acc_ref[...] + b2_ref[...].astype(jnp.float32) + x_ref[...].astype(jnp.float32)
        o_ref[...] = y.astype(o_ref.dtype)


# ----------------------------------------------------------------------------
# Planning helpers
# ----------------------------------------------------------------------------
def _round_up(x, m):
    return ((x + m - 1) // m) * m


def _spec(shape, index_map, *, single=False):
    """BlockSpec; request single-buffering when the block index never changes."""
    if single:
        try:
            return pl.BlockSpec(shape, index_map, pipeline_mode=pl.Buffered(1))
        except (TypeError, AttributeError):
            pass  # older jax without pipeline_mode / pl.Buffered — fall back
    return pl.BlockSpec(shape, index_map)


def _vmem_budget():
    """Generation-aware VMEM budget / limit cap (bytes)."""
    try:
        phys = int(getattr(pltpu.get_tpu_info(), "vmem_capacity_bytes", 64 * _MIB))
    except Exception:
        phys = 64 * _MIB                               # conservative: v7x-sized VMEM
    if phys >= 96 * _MIB:                              # v5e / v6e: 128 MiB physical
        return 100 * _MIB, 110 * _MIB
    return 44 * _MIB, 58 * _MIB                        # v7x: 64 MiB per TensorCore


def _row_tile(N, tm_cap):
    """Largest multiple-of-8 row tile <= tm_cap.  Prefers one that divides N
    (no host-side pad/slice) and >=2 row tiles (v7x 2-TC sharding), but never
    shrinks below ~half the cap / 256 rows for those preferences."""
    n8 = _round_up(max(N, 8), 8)
    tm_cap = max(8, min(_round_up(tm_cap, 8), n8))
    half = _round_up(-(-N // 2), 8)
    if half >= 256:                                    # keep tiles >= 256 rows
        tm_cap = min(tm_cap, half)
    if N % 8 == 0:
        lo = max(128, tm_cap // 2)
        for tm in range(tm_cap, lo - 1, -8):
            if N % tm == 0:
                return tm
    return tm_cap                                      # caller pads the row axis


def _hidden_chunk(M):
    for c in (512, 384, 256, 128):
        if M % c == 0:
            return c
    return M


def _plan(N, E, M, out_bytes, tm_req):
    budget, limit_cap = _vmem_budget()

    # Conservative resident-weight footprint: assume the single-buffer hint may
    # be ignored (x2), bf16 W1/W2 + f32 biases/LN params.
    w_resident = 2 * (2 * E * M * 2) + 2 * (M + 3 * E) * 4

    # ---- resident path: largest row tile that fits the budget ----
    chunk = _hidden_chunk(M)
    for tm_cap in dict.fromkeys((tm_req, 256, 128)):   # dedup, keep order
        tm = _row_tile(N, tm_cap)
        per_tile = (2 * tm * E * 4                     # x tile, double-buffered
                    + 2 * tm * E * out_bytes           # out tile, double-buffered
                    + tm * E * 10                      # ln + acc values (internal)
                    + 3 * tm * chunk * 4)              # h chunk headroom
        est = w_resident + per_tile
        if est <= budget:
            return dict(resident=True, tm=tm, tM=M, chunk=chunk,
                        vmem_est=est, limit_cap=limit_cap)

    # ---- streamed fallback: tile the hidden dim, prefer 512/256 multiples ----
    tm = _row_tile(N, min(tm_req, 256))
    cands = []
    for step in (512, 256, 128):
        cands += [k for k in range(step, M, step) if M % k == 0]
    cands = sorted(set(cands), reverse=True) or [M]
    choice = None
    for tM in cands:
        est = (2 * 2 * E * tM * 2 + 2 * (tM + E) * 4   # streamed W1/W2/b1/b2 (x2 buf)
               + tm * E * (2 + 4)                      # ln (bf16) + acc (f32) scratch
               + 2 * tm * E * 4 + 2 * tm * E * out_bytes
               + 2 * tm * tM * 4)
        choice = dict(resident=False, tm=tm, tM=tM, chunk=tM,
                      vmem_est=est, limit_cap=limit_cap)
        if est <= budget:
            return choice
    return choice                                      # smallest slab; exotic shapes


# ----------------------------------------------------------------------------
# Wrapper
# ----------------------------------------------------------------------------
def mlp_block(x, gamma, beta, w1, b1, w2, b2, *, tm=512):
    """x: (B, S, E).  w1: (E, M), w2: (M, E) in (in, out) layout."""
    B, S, E = x.shape
    M = w1.shape[1]
    N = B * S
    out_bytes = jnp.dtype(x.dtype).itemsize

    plan = _plan(N, E, M, out_bytes, tm)
    tm_eff = plan["tm"]
    N_pad = _round_up(N, tm_eff)
    n_rows = N_pad // tm_eff

    x2d = x.reshape(N, E)
    if N_pad != N:
        # TODO(synk): a masked ragged last tile would avoid this extra HBM pass;
        # _row_tile already prefers tiles that divide N so this is uncommon.
        x2d = jnp.pad(x2d, ((0, N_pad - N), (0, 0)))

    # bf16 weights: halves HBM->VMEM DMA and resident VMEM; f32 accumulation.
    w1b = w1.astype(jnp.bfloat16)
    w2b = w2.astype(jnp.bfloat16)
    gamma2d = gamma.reshape(1, E).astype(jnp.float32)
    beta2d = beta.reshape(1, E).astype(jnp.float32)
    b1_2d = b1.reshape(1, M).astype(jnp.float32)
    b2_2d = b2.reshape(1, E).astype(jnp.float32)

    vmem_limit = int(max(32 * _MIB,
                         min(plan["limit_cap"], plan["vmem_est"] + 16 * _MIB)))

    if plan["resident"]:
        cost = pl.CostEstimate(
            flops=4 * N_pad * E * M,
            transcendentals=N_pad * M,
            bytes_accessed=2 * N_pad * E * out_bytes + 2 * E * M * 2)
        kernel = functools.partial(mlp_resident_kernel, m_chunk=plan["chunk"])
        out = pl.pallas_call(
            kernel,
            out_shape=jax.ShapeDtypeStruct((N_pad, E), x.dtype),
            grid_spec=pltpu.PrefetchScalarGridSpec(
                num_scalar_prefetch=0,
                grid=(n_rows,),
                in_specs=[
                    pl.BlockSpec((tm_eff, E), lambda i: (i, 0)),      # x rows
                    _spec((1, E), lambda i: (0, 0), single=True),     # LN gamma
                    _spec((1, E), lambda i: (0, 0), single=True),     # LN beta
                    _spec((E, M), lambda i: (0, 0), single=True),     # W1 (resident)
                    _spec((1, M), lambda i: (0, 0), single=True),     # b1
                    _spec((M, E), lambda i: (0, 0), single=True),     # W2 (resident)
                    _spec((1, E), lambda i: (0, 0), single=True),     # b2
                ],
                out_specs=pl.BlockSpec((tm_eff, E), lambda i: (i, 0)),
            ),
            compiler_params=pltpu.CompilerParams(
                dimension_semantics=("parallel",),
                vmem_limit_bytes=vmem_limit),
            cost_estimate=cost,
        )(x2d, gamma2d, beta2d, w1b, b1_2d, w2b, b2_2d)
    else:
        tM = plan["tM"]
        n_m = M // tM
        cost = pl.CostEstimate(
            flops=4 * N_pad * E * M,
            transcendentals=N_pad * M,
            bytes_accessed=2 * N_pad * E * out_bytes + n_rows * 2 * E * M * 2)
        out = pl.pallas_call(
            mlp_streamed_kernel,
            out_shape=jax.ShapeDtypeStruct((N_pad, E), x.dtype),
            grid_spec=pltpu.PrefetchScalarGridSpec(
                num_scalar_prefetch=0,
                grid=(n_rows, n_m),
                in_specs=[
                    pl.BlockSpec((tm_eff, E), lambda i, j: (i, 0)),   # x rows
                    _spec((1, E), lambda i, j: (0, 0), single=True),  # LN gamma
                    _spec((1, E), lambda i, j: (0, 0), single=True),  # LN beta
                    pl.BlockSpec((E, tM), lambda i, j: (0, j)),       # W1 slab
                    pl.BlockSpec((1, tM), lambda i, j: (0, j)),       # b1 slab
                    pl.BlockSpec((tM, E), lambda i, j: (j, 0)),       # W2 slab
                    _spec((1, E), lambda i, j: (0, 0), single=True),  # b2
                ],
                out_specs=pl.BlockSpec((tm_eff, E), lambda i, j: (i, 0)),
                scratch_shapes=[
                    pltpu.VMEM((tm_eff, E), jnp.bfloat16),   # cached LayerNorm out
                    pltpu.VMEM((tm_eff, E), jnp.float32),    # second-matmul acc
                ],
            ),
            compiler_params=pltpu.CompilerParams(
                dimension_semantics=("parallel", "arbitrary"),
                vmem_limit_bytes=vmem_limit),
            cost_estimate=cost,
        )(x2d, gamma2d, beta2d, w1b, b1_2d, w2b, b2_2d)

    if N_pad != N:
        out = out[:N]
    return out.reshape(B, S, E)


# ----------------------------------------------------------------------------
# Reference + test
# ----------------------------------------------------------------------------
def reference(x, gamma, beta, w1, b1, w2, b2, matmul_dtype=jnp.float32):
    mean = jnp.mean(x, axis=-1, keepdims=True)
    var = jnp.mean((x - mean) ** 2, axis=-1, keepdims=True)
    ln = (x - mean) / jnp.sqrt(var + LN_EPS) * gamma + beta
    h = jnp.dot(ln.astype(matmul_dtype), w1.astype(matmul_dtype),
                preferred_element_type=jnp.float32) + b1
    h = _gelu(h)
    y = jnp.dot(h.astype(matmul_dtype), w2.astype(matmul_dtype),
                preferred_element_type=jnp.float32) + b2
    return y + x


if __name__ == "__main__":
    # Small shapes consistent with the module (embedding_dim, mlp_size scaled down)
    B, S, E, M = 2, 8, 32, 128

    key = jax.random.PRNGKey(0)
    kx, kw1, kb1, kw2, kb2 = jax.random.split(key, 5)

    x = jax.random.normal(kx, (B, S, E), dtype=jnp.float32)

    # LayerNorm params (PyTorch default init: weight=1, bias=0)
    gamma = jnp.ones((E,), dtype=jnp.float32)
    beta = jnp.zeros((E,), dtype=jnp.float32)

    # Linear params ~ PyTorch U(-1/sqrt(fan_in), 1/sqrt(fan_in)), (in, out) layout.
    lim1 = 1.0 / math.sqrt(E)
    w1 = jax.random.uniform(kw1, (E, M), minval=-lim1, maxval=lim1, dtype=jnp.float32)
    b1 = jax.random.uniform(kb1, (M,), minval=-lim1, maxval=lim1, dtype=jnp.float32)
    lim2 = 1.0 / math.sqrt(M)
    w2 = jax.random.uniform(kw2, (M, E), minval=-lim2, maxval=lim2, dtype=jnp.float32)
    b2 = jax.random.uniform(kb2, (E,), minval=-lim2, maxval=lim2, dtype=jnp.float32)

    out = jax.block_until_ready(mlp_block(x, gamma, beta, w1, b1, w2, b2))
    assert out.shape == (B, S, E)
    assert bool(jnp.all(jnp.isfinite(out)))

    # Check against a reference that uses the same bf16 matmul operands (tight),
    # and against the pure-f32 reference (loose, bf16 rounding only).
    ref_bf16 = reference(x, gamma, beta, w1, b1, w2, b2, matmul_dtype=jnp.bfloat16)
    assert jnp.allclose(out, ref_bf16, atol=5e-3, rtol=5e-3), "mismatch vs bf16 reference"
    ref_f32 = reference(x, gamma, beta, w1, b1, w2, b2, matmul_dtype=jnp.float32)
    assert jnp.allclose(out, ref_f32, atol=5e-2, rtol=5e-2), "mismatch vs f32 reference"

    print("KERNEL_OK")
</pallas_src>

<mosaic_0001>
module attributes {stable_mosaic.version = 11 : i64} {
  func.func @mlp_resident_kernel(%arg0: i32, %arg1: memref<16x32xf32, #tpu.memory_space<vmem>>, %arg2: memref<1x32xf32, #tpu.memory_space<vmem>>, %arg3: memref<1x32xf32, #tpu.memory_space<vmem>>, %arg4: memref<32x128xbf16, #tpu.memory_space<vmem>>, %arg5: memref<1x128xf32, #tpu.memory_space<vmem>>, %arg6: memref<128x32xbf16, #tpu.memory_space<vmem>>, %arg7: memref<1x32xf32, #tpu.memory_space<vmem>>, %arg8: memref<16x32xf32, #tpu.memory_space<vmem>>) attributes {dimension_semantics = [#tpu.dimension_semantics<parallel>], iteration_bounds = array<i64: 1>, scalar_prefetch = 0 : i64, scratch_operands = 0 : i64, tpu.core_type = #tpu.core_type<tc>, window_params = [{transform_indices = @transform_0, window_bounds = array<i64: 16, 32>}, {pipeline_mode = #tpu.pipeline_mode<synchronous>, transform_indices = @transform_1, window_bounds = array<i64: 1, 32>}, {pipeline_mode = #tpu.pipeline_mode<synchronous>, transform_indices = @transform_2, window_bounds = array<i64: 1, 32>}, {pipeline_mode = #tpu.pipeline_mode<synchronous>, transform_indices = @transform_3, window_bounds = array<i64: 32, 128>}, {pipeline_mode = #tpu.pipeline_mode<synchronous>, transform_indices = @transform_4, window_bounds = array<i64: 1, 128>}, {pipeline_mode = #tpu.pipeline_mode<synchronous>, transform_indices = @transform_5, window_bounds = array<i64: 128, 32>}, {pipeline_mode = #tpu.pipeline_mode<synchronous>, transform_indices = @transform_6, window_bounds = array<i64: 1, 32>}, {transform_indices = @transform_7, window_bounds = array<i64: 16, 32>}]} {
    %c0 = arith.constant 0 : index
    %c0_0 = arith.constant 0 : index
    %0 = vector.load %arg1[%c0, %c0_0] : memref<16x32xf32, #tpu.memory_space<vmem>>, vector<16x32xf32>
    %cst = arith.constant dense<0.000000e+00> : vector<16xf32>
    %1 = vector.multi_reduction <add>, %0, %cst [1] : vector<16x32xf32> to vector<16xf32>
    %2 = vector.shape_cast %1 : vector<16xf32> to vector<16x1xf32>
    %cst_1 = arith.constant 3.200000e+01 : f32
    %3 = vector.broadcast %cst_1 : f32 to vector<16x1xf32>
    %4 = arith.divf %2, %3 : vector<16x1xf32>
    %5 = vector.broadcast %4 : vector<16x1xf32> to vector<16x32xf32>
    %6 = arith.subf %0, %5 : vector<16x32xf32>
    %7 = arith.mulf %6, %6 : vector<16x32xf32>
    %cst_2 = arith.constant dense<0.000000e+00> : vector<16xf32>
    %8 = vector.multi_reduction <add>, %7, %cst_2 [1] : vector<16x32xf32> to vector<16xf32>
    %9 = vector.shape_cast %8 : vector<16xf32> to vector<16x1xf32>
    %cst_3 = arith.constant 3.200000e+01 : f32
    %10 = vector.broadcast %cst_3 : f32 to vector<16x1xf32>
    %11 = arith.divf %9, %10 : vector<16x1xf32>
    %cst_4 = arith.constant 9.99999974E-6 : f32
    %12 = vector.broadcast %cst_4 : f32 to vector<16x1xf32>
    %13 = arith.addf %11, %12 : vector<16x1xf32>
    %14 = math.rsqrt %13 : vector<16x1xf32>
    %15 = vector.broadcast %14 : vector<16x1xf32> to vector<16x32xf32>
    %16 = arith.mulf %6, %15 : vector<16x32xf32>
    %c0_5 = arith.constant 0 : index
    %c0_6 = arith.constant 0 : index
    %17 = vector.load %arg2[%c0_5, %c0_6] : memref<1x32xf32, #tpu.memory_space<vmem>>, vector<1x32xf32>
    %18 = vector.broadcast %17 : vector<1x32xf32> to vector<16x32xf32>
    %19 = arith.mulf %16, %18 : vector<16x32xf32>
    %c0_7 = arith.constant 0 : index
    %c0_8 = arith.constant 0 : index
    %20 = vector.load %arg3[%c0_7, %c0_8] : memref<1x32xf32, #tpu.memory_space<vmem>>, vector<1x32xf32>
    %21 = vector.broadcast %20 : vector<1x32xf32> to vector<16x32xf32>
    %22 = arith.addf %19, %21 : vector<16x32xf32>
    %23 = arith.truncf %22 : vector<16x32xf32> to vector<16x32xbf16>
    %c0_9 = arith.constant 0 : index
    %c0_10 = arith.constant 0 : index
    %24 = vector.load %arg7[%c0_9, %c0_10] : memref<1x32xf32, #tpu.memory_space<vmem>>, vector<1x32xf32>
    %25 = vector.broadcast %24 : vector<1x32xf32> to vector<16x32xf32>
    %26 = arith.addf %0, %25 : vector<16x32xf32>
    %c0_11 = arith.constant 0 : index
    %c0_12 = arith.constant 0 : index
    %27 = vector.load %arg4[%c0_11, %c0_12] : memref<32x128xbf16, #tpu.memory_space<vmem>>, vector<32x128xbf16>
    %cst_13 = arith.constant dense<0.000000e+00> : vector<16x128xf32>
    %28 = tpu.matmul %23, %27, %cst_13 {dimension_numbers = #tpu.dot_dimension_numbers<[1], [0], [0], [1], [0, 0, 1, 1], [], []>} : vector<16x32xbf16>, vector<32x128xbf16>, vector<16x128xf32> -> vector<16x128xf32>
    %c0_14 = arith.constant 0 : index
    %c0_15 = arith.constant 0 : index
    %29 = vector.load %arg5[%c0_14, %c0_15] : memref<1x128xf32, #tpu.memory_space<vmem>>, vector<1x128xf32>
    %30 = vector.broadcast %29 : vector<1x128xf32> to vector<16x128xf32>
    %31 = arith.addf %28, %30 : vector<16x128xf32>
    %cst_16 = arith.constant 5.000000e-01 : f32
    %32 = vector.broadcast %cst_16 : f32 to vector<16x128xf32>
    %33 = arith.mulf %32, %31 : vector<16x128xf32>
    %cst_17 = arith.constant 0.707106769 : f32
    %34 = vector.broadcast %cst_17 : f32 to vector<16x128xf32>
    %35 = arith.mulf %31, %34 : vector<16x128xf32>
    %36 = math.erf %35 : vector<16x128xf32>
    %cst_18 = arith.constant 1.000000e+00 : f32
    %37 = vector.broadcast %cst_18 : f32 to vector<16x128xf32>
    %38 = arith.addf %37, %36 : vector<16x128xf32>
    %39 = arith.mulf %33, %38 : vector<16x128xf32>
    %40 = arith.truncf %39 : vector<16x128xf32> to vector<16x128xbf16>
    %c0_19 = arith.constant 0 : index
    %c0_20 = arith.constant 0 : index
    %41 = vector.load %arg6[%c0_19, %c0_20] : memref<128x32xbf16, #tpu.memory_space<vmem>>, vector<128x32xbf16>
    %cst_21 = arith.constant dense<0.000000e+00> : vector<16x32xf32>
    %42 = tpu.matmul %40, %41, %cst_21 {dimension_numbers = #tpu.dot_dimension_numbers<[1], [0], [0], [1], [0, 0, 1, 1], [], []>} : vector<16x128xbf16>, vector<128x32xbf16>, vector<16x32xf32> -> vector<16x32xf32>
    %43 = arith.addf %26, %42 : vector<16x32xf32>
    %c0_22 = arith.constant 0 : index
    %c0_23 = arith.constant 0 : index
    %44 = vector.load %arg8[%c0_22, %c0_23] : memref<16x32xf32, #tpu.memory_space<vmem>>, vector<16x32xf32>
    tpu.vector_store %arg8[%c0_22, %c0_23], %43 {strides = array<i32>} : memref<16x32xf32, #tpu.memory_space<vmem>>, vector<16x32xf32>,
    return
  }
  func.func @transform_0(%arg0: i32) -> (i32, i32) {
    %c0_i32 = arith.constant 0 : i32
    %c0_i32_0 = arith.constant 0 : i32
    return %arg0, %c0_i32 : i32, i32
  }
  func.func @transform_1(%arg0: i32) -> (i32, i32) {
    %c0_i32 = arith.constant 0 : i32
    %c0_i32_0 = arith.constant 0 : i32
    %c0_i32_1 = arith.constant 0 : i32
    return %c0_i32, %c0_i32_0 : i32, i32
  }
  func.func @transform_2(%arg0: i32) -> (i32, i32) {
    %c0_i32 = arith.constant 0 : i32
    %c0_i32_0 = arith.constant 0 : i32
    %c0_i32_1 = arith.constant 0 : i32
    return %c0_i32, %c0_i32_0 : i32, i32
  }
  func.func @transform_3(%arg0: i32) -> (i32, i32) {
    %c0_i32 = arith.constant 0 : i32
    %c0_i32_0 = arith.constant 0 : i32
    %c0_i32_1 = arith.constant 0 : i32
    return %c0_i32, %c0_i32_0 : i32, i32
  }
  func.func @transform_4(%arg0: i32) -> (i32, i32) {
    %c0_i32 = arith.constant 0 : i32
    %c0_i32_0 = arith.constant 0 : i32
    %c0_i32_1 = arith.constant 0 : i32
    return %c0_i32, %c0_i32_0 : i32, i32
  }
  func.func @transform_5(%arg0: i32) -> (i32, i32) {
    %c0_i32 = arith.constant 0 : i32
    %c0_i32_0 = arith.constant 0 : i32
    %c0_i32_1 = arith.constant 0 : i32
    return %c0_i32, %c0_i32_0 : i32, i32
  }
  func.func @transform_6(%arg0: i32) -> (i32, i32) {
    %c0_i32 = arith.constant 0 : i32
    %c0_i32_0 = arith.constant 0 : i32
    %c0_i32_1 = arith.constant 0 : i32
    return %c0_i32, %c0_i32_0 : i32, i32
  }
  func.func @transform_7(%arg0: i32) -> (i32, i32) {
    %c0_i32 = arith.constant 0 : i32
    %c0_i32_0 = arith.constant 0 : i32
    return %arg0, %c0_i32 : i32, i32
  }
}

</mosaic_0001>

<llo_original>
// kernel: tpu_custom_call.1
$region0: #{tpu_custom_call.1}
  #allocation0 [shape = 'u32[]', space=smem, size = 0x4, offset = 0x4, fixed_abs, tag = 'smem constant byte address 0x4 - core index']
  #allocation1 [shape = 'u32[144,128]{1,0:T(1,128)}', space=vmem, size = 0x12000, scoped, tag = 'internal scratch']
  %s0 = inlined_call_operand.vmem [shape: f32[16,32], index: 0, kind: input, shape index: {}]
  %s1 = inlined_call_operand.vmem [shape: f32[1,32], index: 1, kind: input, shape index: {}]
  %s2 = inlined_call_operand.vmem [shape: f32[1,32], index: 2, kind: input, shape index: {}]
  %s3 = inlined_call_operand.vmem [shape: bf16[32,128], index: 3, kind: input, shape index: {}]
  %s4 = inlined_call_operand.vmem [shape: f32[1,128], index: 4, kind: input, shape index: {}]
  %s5 = inlined_call_operand.vmem [shape: bf16[128,32], index: 5, kind: input, shape index: {}]
  %s6 = inlined_call_operand.vmem [shape: f32[1,32], index: 6, kind: input, shape index: {}]
  %s7 = inlined_call_operand.hbm [shape: f32[16,32], index: 7, kind: output, shape index: {}]
  %s8 = sld [smem:[#allocation0]]
  $region38: #{tpu_custom_call.1} parent=0
    _
  %s10 = ssub.s32 1, %s8
  %s11 = scalar_select 0, %s10, %s8
  $region1: #{tpu_custom_call.1} parent=0
    #allocation2 [shape = 'u8[8192]{0}', space=vmem, size = 0x2000, scoped, tag = 'output window, operand 0, single buffered']
    #allocation3 [shape = 's32[1]{0}', space=sflag, size = 0x4, scoped, tag = 'scoped memory for tpu_custom_call.1']
    %12 = vsyncpa [#allocation3], 0
    // Predicated region
    $region2: #{tpu_custom_call.1} parent=1 // pred_check
      _
    $region3: #{tpu_custom_call.1} parent=1 // pred_check_branch
      %14 = sbr.rel (0) target = $region5
    $region4: #{tpu_custom_call.1} parent=1 // pred_region
      _
    $region5: #{tpu_custom_call.1} parent=1 // pred_fallthru
      _
    // Predicated region
    $region6: #{tpu_custom_call.1} parent=1 // pred_check
      _
    $region7: #{tpu_custom_call.1} parent=1 // pred_check_branch
      %16 = sbr.rel (0) target = $region9
    $region8: #{tpu_custom_call.1} parent=1 // pred_region
      _
    $region9: #{tpu_custom_call.1} parent=1 // pred_fallthru
      _
    // Predicated region
    $region10: #{tpu_custom_call.1} parent=1 // pred_check
      _
    $region11: #{tpu_custom_call.1} parent=1 // pred_check_branch
      %18 = sbr.rel (0) target = $region13
    $region12: #{tpu_custom_call.1} parent=1 // pred_region
      _
    $region13: #{tpu_custom_call.1} parent=1 // pred_fallthru
      _
    // Predicated region
    $region14: #{tpu_custom_call.1} parent=1 // pred_check
      _
    $region15: #{tpu_custom_call.1} parent=1 // pred_check_branch
      %20 = sbr.rel (0) target = $region17
    $region16: #{tpu_custom_call.1} parent=1 // pred_region
      _
    $region17: #{tpu_custom_call.1} parent=1 // pred_fallthru
      _
    // Predicated region
    $region18: #{tpu_custom_call.1} parent=1 // pred_check
      _
    $region19: #{tpu_custom_call.1} parent=1 // pred_check_branch
      %22 = sbr.rel (0) target = $region21
    $region20: #{tpu_custom_call.1} parent=1 // pred_region
      _
    $region21: #{tpu_custom_call.1} parent=1 // pred_fallthru
      _
    // Predicated region
    $region22: #{tpu_custom_call.1} parent=1 // pred_check
      _
    $region23: #{tpu_custom_call.1} parent=1 // pred_check_branch
      %24 = sbr.rel (0) target = $region25
    $region24: #{tpu_custom_call.1} parent=1 // pred_region
      _
    $region25: #{tpu_custom_call.1} parent=1 // pred_fallthru
      _
    // Predicated region
    $region26: #{tpu_custom_call.1} parent=1 // pred_check
      _
    $region27: #{tpu_custom_call.1} parent=1 // pred_check_branch
      %26 = sbr.rel (0) target = $region29
    $region28: #{tpu_custom_call.1} parent=1 // pred_region
      _
    $region29: #{tpu_custom_call.1} parent=1 // pred_fallthru
      _
    %v28 = vld [vmem:[%s0] sm:$0xff]
    %v29 = vld [vmem:[%s0 + $0x8] sm:$0xff]
    %vm30 = vcmask 261120
    %v31 = vsel %vm30, %v28, 0.0
    %32 = vadd.xlane.f32.xlu0 %v31
    %v33 = vpop.xlane.xlu0 %32
    %v34 = vsel %vm30, %v29, 0.0
    %35 = vadd.xlane.f32.xlu0 %v34
    %v36 = vpop.xlane.xlu0 %35
    %v37 = vrcp.pop 32.0
    %v38 = vmul.f32 %v33, %v37
    %v39 = vmul.f32 %v36, %v37
    %v40 = vsub.f32 %v28, %v38
    %v41 = vsub.f32 %v29, %v39
    %v42 = vmul.f32 %v40, %v40
    %v43 = vmul.f32 %v41, %v41
    %v44 = vsel %vm30, %v42, 0.0
    %45 = vadd.xlane.f32.xlu0 %v44
    %v46 = vpop.xlane.xlu0 %45
    %v47 = vsel %vm30, %v43, 0.0
    %48 = vadd.xlane.f32.xlu0 %v47
    %v49 = vpop.xlane.xlu0 %48
    %v50 = vmul.f32 %v46, %v37
    %v51 = vmul.f32 %v49, %v37
    %v52 = vadd.f32 %v50, 1e-05
    %v53 = vadd.f32 %v51, 1e-05
    %v54 = vrsqrt.pop %v52
    %v55 = vrsqrt.pop %v53
    %v56 = vmul.f32 %v40, %v54
    %v57 = vmul.f32 %v41, %v55
    %v58 = vld [vmem:[%s1] sm:$0x1]
    %v60 = vlaneseq
    %v61 = vshrl.u32 %v60, 7
    %v62 = vsub.s32 0, %v61
    %v63 = vrot.slane %v58, %v62
    %v65 = vmul.f32 %v56, %v63
    %v66 = vmul.f32 %v57, %v63
    %v67 = vld [vmem:[%s2] sm:$0x1]
    %v69 = vlaneseq
    %v70 = vshrl.u32 %v69, 7
    %v71 = vsub.s32 0, %v70
    %v72 = vrot.slane %v67, %v71
    %v74 = vadd.f32 %v65, %v72
    %v75 = vadd.f32 %v66, %v72
    %v76 = vpack.c.bf16 %v75, %v74
    %v77 = vld [vmem:[%s6] sm:$0x1]
    %v79 = vlaneseq
    %v80 = vshrl.u32 %v79, 7
    %v81 = vsub.s32 0, %v80
    %v82 = vrot.slane %v77, %v81
    %v84 = vadd.f32 %v28, %v82
    %v85 = vadd.f32 %v29, %v82
    %v86 = vld [vmem:[%s3] sm:$0xf]
    %v87 = vld [vmem:[%s3 + $0x4] sm:$0xf]
    %v88 = vld [vmem:[%s3 + $0x8] sm:$0xf]
    %v89 = vld [vmem:[%s3 + $0xc] sm:$0xf]
    %v90 = vld [vmem:[%s4] sm:$0x1]
    %v92 = vlaneseq
    %v93 = vshrl.u32 %v92, 7
    %v94 = vsub.s32 0, %v93
    %v95 = vrot.slane %v90, %v94
    %v101 = vunpack.c.l.b16 %v86
    %v102 = vunpack.c.l.b16 %v87
    %v103 = vunpack.c.l.b16 %v88
    %v104 = vunpack.c.l.b16 %v89
    %v105 = vpack.c.b16 %v102, %v101
    %v106 = vpack.c.b16 %v104, %v103
    %v110 = vsel %vm30, %v76, 0
    %112 = vmatprep.subr.bf16.mxu0 0
    %113 = vmatpush1.bf16.msra.mxu0 0
    %114 = vmatprep.subr.bf16.mxu0 0
    %115 = vmatpush1.bf16.msra.mxu0 0
    %116 = vmatprep.subr.bf16.mxu0 0
    %117 = vmatpush1.bf16.msra.mxu0 0
    %118 = vmatprep.subr.bf16.mxu0 0
    %119 = vmatpush1.bf16.msra.mxu0 0
    %120 = vmatprep.subr.bf16.mxu0 0
    %121 = vmatpush1.bf16.msra.mxu0 0
    %122 = vmatprep.subr.bf16.mxu0 0
    %123 = vmatpush1.bf16.msra.mxu0 0
    %124 = vmatprep.subr.bf16.mxu0 0
    %125 = vmatpush1.bf16.msra.mxu0 %v106
    %126 = vmatprep.subr.bf16.mxu0 0
    %127 = vmatpush1.bf16.msra.mxu0 %v105
    %128 = vmatprep.subr.bf16.mxu0 0
    %129 = vmatpush2.bf16.msra.mxu0 0
    %130 = vmatprep.subr.bf16.mxu0 0
    %131 = vmatpush2.bf16.msra.mxu0 0
    %132 = vmatprep.subr.bf16.mxu0 0
    %133 = vmatpush2.bf16.msra.mxu0 0
    %134 = vmatprep.subr.bf16.mxu0 0
    %135 = vmatpush2.bf16.msra.mxu0 0
    %136 = vmatprep.subr.bf16.mxu0 0
    %137 = vmatpush2.bf16.msra.mxu0 0
    %138 = vmatprep.subr.bf16.mxu0 0
    %139 = vmatpush2.bf16.msra.mxu0 0
    %140 = vmatprep.subr.bf16.mxu0 0
    %141 = vmatpush2.bf16.msra.mxu0 0
    %142 = vmatprep.subr.bf16.mxu0 0
    %143 = vmatpush2.bf16.msra.mxu0 0
    %144 = vmatprep.mubr.bf16.mxu0 0
    %145 = vmatmul.mubr.bf16.gmra.mxu0 %v110
    %v146 = vpop.f32.mrf.mxu0
    %v147 = vadd.f32 %v95, %v146
    %v148 = vpop.f32.mrf.mxu0
    %v149 = vpop.f32.mrf.mxu0
    %v150 = vadd.f32 %v95, %v149
    %v151 = vpop.f32.mrf.mxu0
    %152 = vdwg.mxu0
    %v153 = vmul.f32 %v147, 0.5
    %v154 = vmul.f32 %v150, 0.5
    %v155 = vmul.f32 %v147, 0.70710677
    %v156 = vmul.f32 %v150, 0.70710677
    %v157 = verf.f32.pop %v155
    %v158 = verf.f32.pop %v156
    %v159 = vadd.f32 %v157, 1.0
    %v160 = vadd.f32 %v158, 1.0
    %v161 = vmul.f32 %v153, %v159
    %v162 = vmul.f32 %v154, %v160
    %v163 = vpack.c.bf16 %v162, %v161
    %v164 = vld [vmem:[%s5] sm:$0xf]
    %v165 = vld [vmem:[%s5 + $0x4] sm:$0xf]
    %v166 = vld [vmem:[%s5 + $0x8] sm:$0xf]
    %v167 = vld [vmem:[%s5 + $0xc] sm:$0xf]
    %v168 = vld [vmem:[%s5 + $0x10] sm:$0xf]
    %v169 = vld [vmem:[%s5 + $0x14] sm:$0xf]
    %v170 = vld [vmem:[%s5 + $0x18] sm:$0xf]
    %v171 = vld [vmem:[%s5 + $0x1c] sm:$0xf]
    %v172 = vld [vmem:[%s5 + $0x20] sm:$0xf]
    %v173 = vld [vmem:[%s5 + $0x24] sm:$0xf]
    %v174 = vld [vmem:[%s5 + $0x28] sm:$0xf]
    %v175 = vld [vmem:[%s5 + $0x2c] sm:$0xf]
    %v176 = vld [vmem:[%s5 + $0x30] sm:$0xf]
    %v177 = vld [vmem:[%s5 + $0x34] sm:$0xf]
    %v178 = vld [vmem:[%s5 + $0x38] sm:$0xf]
    %v179 = vld [vmem:[%s5 + $0x3c] sm:$0xf]
    %v196 = vunpack.c.l.b16 %v164
    %v197 = vunpack.c.l.b16 %v165
    %v198 = vunpack.c.l.b16 %v166
    %v199 = vunpack.c.l.b16 %v167
    %v200 = vunpack.c.l.b16 %v168
    %v201 = vunpack.c.l.b16 %v169
    %v202 = vunpack.c.l.b16 %v170
    %v203 = vunpack.c.l.b16 %v171
    %v204 = vunpack.c.l.b16 %v172
    %v205 = vunpack.c.l.b16 %v173
    %v206 = vunpack.c.l.b16 %v174
    %v207 = vunpack.c.l.b16 %v175
    %v208 = vunpack.c.l.b16 %v176
    %v209 = vunpack.c.l.b16 %v177
    %v210 = vunpack.c.l.b16 %v178
    %v211 = vunpack.c.l.b16 %v179
    %v212 = vpack.c.b16 %v197, %v196
    %v213 = vpack.c.b16 %v199, %v198
    %v214 = vpack.c.b16 %v201, %v200
    %v215 = vpack.c.b16 %v203, %v202
    %v216 = vpack.c.b16 %v205, %v204
    %v217 = vpack.c.b16 %v207, %v206
    %v218 = vpack.c.b16 %v209, %v208
    %v219 = vpack.c.b16 %v211, %v210
    %228 = vmatprep.subr.bf16.mxu0 0
    %229 = vmatpush1.bf16.msra.mxu0 %v219
    %230 = vmatprep.subr.bf16.mxu0 0
    %231 = vmatpush1.bf16.msra.mxu0 %v218
    %232 = vmatprep.subr.bf16.mxu0 0
    %233 = vmatpush1.bf16.msra.mxu0 %v217
    %234 = vmatprep.subr.bf16.mxu0 0
    %235 = vmatpush1.bf16.msra.mxu0 %v216
    %236 = vmatprep.subr.bf16.mxu0 0
    %237 = vmatpush1.bf16.msra.mxu0 %v215
    %238 = vmatprep.subr.bf16.mxu0 0
    %239 = vmatpush1.bf16.msra.mxu0 %v214
    %240 = vmatprep.subr.bf16.mxu0 0
    %241 = vmatpush1.bf16.msra.mxu0 %v213
    %242 = vmatprep.subr.bf16.mxu0 0
    %243 = vmatpush1.bf16.msra.mxu0 %v212
    %244 = vmatprep.subr.bf16.mxu0 0
    %245 = vmatpush2.bf16.msra.mxu0 0
    %246 = vmatprep.subr.bf16.mxu0 0
    %247 = vmatpush2.bf16.msra.mxu0 0
    %248 = vmatprep.subr.bf16.mxu0 0
    %249 = vmatpush2.bf16.msra.mxu0 0
    %250 = vmatprep.subr.bf16.mxu0 0
    %251 = vmatpush2.bf16.msra.mxu0 0
    %252 = vmatprep.subr.bf16.mxu0 0
    %253 = vmatpush2.bf16.msra.mxu0 0
    %254 = vmatprep.subr.bf16.mxu0 0
    %255 = vmatpush2.bf16.msra.mxu0 0
    %256 = vmatprep.subr.bf16.mxu0 0
    %257 = vmatpush2.bf16.msra.mxu0 0
    %258 = vmatprep.subr.bf16.mxu0 0
    %259 = vmatpush2.bf16.msra.mxu0 0
    %260 = vmatprep.mubr.bf16.mxu0 0
    %261 = vmatmul.mubr.bf16.gmra.mxu0 %v163
    %v262 = vpop.f32.mrf.mxu0
    %v263 = vadd.f32 0.0, %v262
    %v264 = vpop.f32.mrf.mxu0
    %v265 = vpop.f32.mrf.mxu0
    %v266 = vadd.f32 0.0, %v265
    %v267 = vpop.f32.mrf.mxu0
    %268 = vdwg.mxu0
    %v269 = vadd.f32 %v84, %v263
    %v270 = vadd.f32 %v85, %v266
    %271 = vst.msk [vmem:[#allocation2] sm:$0xff] %vm30, %v269
    %272 = vst.msk [vmem:[#allocation2 + $0x8] sm:$0xff] %vm30, %v270
    // Predicated region
    $region30: #{tpu_custom_call.1} parent=1 // pred_check
      _
    $region31: #{tpu_custom_call.1} parent=1 // pred_check_branch
      %274 = sbr.rel (0) target = $region33
    $region32: #{tpu_custom_call.1} parent=1 // pred_region
      %s276 = ssub.s32 256, 256
      %277 = vsyncadd [#allocation3], %s276
      %s278 = sshll.u32 [#allocation2], 4
      %s279 = int_to_ptr.vmem [resolvable:$true] %s278
      %284 = dma.vmem_to_hbm [thread:$0]  %s279, 256, %s7, [#allocation3], 128, 128, 8
    $region33: #{tpu_custom_call.1} parent=1 // pred_fallthru
      _
    // Predicated region
    $region34: #{tpu_custom_call.1} parent=1 // pred_check
      _
    $region35: #{tpu_custom_call.1} parent=1 // pred_check_branch
      %286 = sbr.rel (0) target = $region37
    $region36: #{tpu_custom_call.1} parent=1 // pred_region
      %287 = dma.done [#allocation3], 256
    $region37: #{tpu_custom_call.1} parent=1 // pred_fallthru
      _
    %288 = vsyncpa [#allocation3], 1

</llo_original>
